<compile_context>
chip_gen: v7x
topology: tpu7x:2x2x1
jax: 0.10.0
libtpu: 0.0.40
codegen_flags: <defaults>
</compile_context>

<pallas_src>
import functools

import jax
import jax.numpy as jnp
import numpy as np
from jax.experimental import pallas as pl
from jax.experimental.pallas import tpu as pltpu


def _round_up(a, b):
    return ((a + b - 1) // b) * b


def _inv_loss_kernel(x_ref, t_ref, o_ref, s_acc, sq_acc, *,
                     lamda, n_val, hw, hw_tile, need_mask):
    # x_ref / t_ref: (row_tile, hw_tile) input tiles.
    # o_ref:         (row_tile, 1) per-row loss (written on the last hw step).
    # s_acc/sq_acc:  (row_tile, 1) running sum(d) / sum(d*d) across hw chunks.
    j = pl.program_id(1)

    @pl.when(j == 0)
    def _():
        s_acc[...] = jnp.zeros_like(s_acc)
        sq_acc[...] = jnp.zeros_like(sq_acc)

    d = x_ref[...].astype(jnp.float32) - t_ref[...].astype(jnp.float32)
    if need_mask:
        # Ragged H*W tail: zero out-of-bounds columns of the last hw block.
        col = jax.lax.broadcasted_iota(jnp.int32, d.shape, 1) + j * hw_tile
        d = jnp.where(col < hw, d, 0.0)

    s_acc[...] += jnp.sum(d, axis=-1, keepdims=True)
    sq_acc[...] += jnp.sum(d * d, axis=-1, keepdims=True)

    @pl.when(j == pl.num_programs(1) - 1)
    def _():
        inv_n = 1.0 / float(n_val)
        s = s_acc[...]
        # Square only AFTER accumulating sum(d) over all hw chunks.
        o_ref[...] = sq_acc[...] * inv_n - (lamda * inv_n * inv_n) * (s * s)


def _choose_tiles(rows, hw, elem_bytes, target_bytes):
    """Pick (row_tile, hw_tile) so one input block is roughly target_bytes."""
    rows8 = _round_up(rows, 8)
    hw_pad = _round_up(hw, 128)
    row_bytes = hw_pad * elem_bytes
    if 8 * row_bytes <= target_bytes:
        # Whole H*W rows fit comfortably: full-extent lane dim, stack rows.
        row_tile = min(rows8, max(8, (target_bytes // row_bytes) // 8 * 8))
        hw_tile = hw
    else:
        # Large images: tile the H*W (lane) axis so block size stays bounded.
        row_tile = min(rows8, 64)
        hw_tile = max(128, (target_bytes // (row_tile * elem_bytes)) // 128 * 128)
    return row_tile, hw_tile


def inv_loss(x, target, lamda=0.5, *, target_block_bytes=2 * 1024 * 1024):
    """x, target: (N, C, H, W) arrays. Returns scalar float32 loss."""
    assert x.shape == target.shape
    n, c, h, w = x.shape
    n_val = h * w
    rows = n * c
    hw = h * w

    # Contiguous-dim collapse: no copy, no jnp.pad (partial blocks are handled
    # in-kernel by masking / dropped OOB writes).
    x2 = x.reshape(rows, hw)
    t2 = target.reshape(rows, hw)
    elem_bytes = jnp.dtype(x2.dtype).itemsize  # bf16 inputs stream at 2B/elem

    row_tile, hw_tile = _choose_tiles(rows, hw, elem_bytes, target_block_bytes)
    n_row_chunks = pl.cdiv(rows, row_tile)
    n_hw_chunks = pl.cdiv(hw, hw_tile)
    need_mask = (hw_tile != hw) and (hw % hw_tile != 0)

    kernel = functools.partial(
        _inv_loss_kernel, lamda=float(lamda), n_val=n_val,
        hw=hw, hw_tile=hw_tile, need_mask=need_mask)

    partials = pl.pallas_call(
        kernel,
        out_shape=jax.ShapeDtypeStruct((rows, 1), jnp.float32),
        grid_spec=pltpu.PrefetchScalarGridSpec(
            num_scalar_prefetch=0,
            grid=(n_row_chunks, n_hw_chunks),
            in_specs=[
                pl.BlockSpec((row_tile, hw_tile), lambda i, j: (i, j)),
                pl.BlockSpec((row_tile, hw_tile), lambda i, j: (i, j)),
            ],
            out_specs=pl.BlockSpec((row_tile, 1), lambda i, j: (i, 0)),
            scratch_shapes=[
                pltpu.VMEM((row_tile, 1), jnp.float32),  # sum(d)
                pltpu.VMEM((row_tile, 1), jnp.float32),  # sum(d*d)
            ],
        ),
        compiler_params=pltpu.CompilerParams(
            dimension_semantics=("parallel", "arbitrary"),
            vmem_limit_bytes=32 * 1024 * 1024,
        ),
    )(x2, t2)

    # Tiny (N*C)-element final reduction in the wrapper (megacore-safe).
    return jnp.sum(partials)


def _inv_loss_ref(x, target, lamda=0.5):
    n, c, h, w = x.shape
    n_val = h * w
    d = x.astype(jnp.float32) - target.astype(jnp.float32)
    mse = jnp.sum(d * d, axis=(2, 3)) / n_val
    s = jnp.sum(d, axis=(2, 3))
    mss = -lamda * (s * s) / (n_val ** 2)
    return jnp.sum(mse + mss)


if __name__ == "__main__":
    key = jax.random.PRNGKey(0)
    k1, k2, k3, k4 = jax.random.split(key, 4)

    # Primary small shape consistent with the module (NCHW).
    N, C, H, W = 2, 4, 16, 16
    x = jax.random.normal(k1, (N, C, H, W), dtype=jnp.float32)
    t = jax.random.normal(k2, (N, C, H, W), dtype=jnp.float32)
    loss = jax.block_until_ready(inv_loss(x, t, lamda=0.5))
    ref = jax.block_until_ready(_inv_loss_ref(x, t, lamda=0.5))
    np.testing.assert_allclose(np.asarray(loss), np.asarray(ref),
                               rtol=1e-5, atol=1e-5)

    # Second check: force the hw-chunked + lane-masked + partial-row-block
    # path with a tiny block budget and ragged shapes.
    N2, C2, H2, W2 = 2, 3, 16, 17  # rows=6 (partial row block), hw=272 (ragged)
    x_b = jax.random.normal(k3, (N2, C2, H2, W2), dtype=jnp.float32)
    t_b = jax.random.normal(k4, (N2, C2, H2, W2), dtype=jnp.float32)
    loss_b = jax.block_until_ready(
        inv_loss(x_b, t_b, lamda=0.7, target_block_bytes=4096))
    ref_b = jax.block_until_ready(_inv_loss_ref(x_b, t_b, lamda=0.7))
    np.testing.assert_allclose(np.asarray(loss_b), np.asarray(ref_b),
                               rtol=1e-5, atol=1e-5)

    print("KERNEL_OK")
</pallas_src>

<mosaic_0001>
module attributes {stable_mosaic.version = 11 : i64} {
  func.func @_inv_loss_kernel(%arg0: i32, %arg1: i32, %arg2: memref<8x256xf32, #tpu.memory_space<vmem>>, %arg3: memref<8x256xf32, #tpu.memory_space<vmem>>, %arg4: memref<8x1xf32, #tpu.memory_space<vmem>>, %arg5: memref<8x1xf32, #tpu.memory_space<vmem>>, %arg6: memref<8x1xf32, #tpu.memory_space<vmem>>) attributes {dimension_semantics = [#tpu.dimension_semantics<parallel>, #tpu.dimension_semantics<arbitrary>], iteration_bounds = array<i64: 1, 1>, scalar_prefetch = 0 : i64, scratch_operands = 2 : i64, tpu.core_type = #tpu.core_type<tc>, window_params = [{transform_indices = @transform_0, window_bounds = array<i64: 8, 256>}, {transform_indices = @transform_1, window_bounds = array<i64: 8, 256>}, {transform_indices = @transform_2, window_bounds = array<i64: 8, 1>}]} {
    %c0_i32 = arith.constant 0 : i32
    %0 = arith.cmpi eq, %arg1, %c0_i32 : i32
    %1 = arith.extui %0 : i1 to i32
    %c0_i32_0 = arith.constant 0 : i32
    %2 = arith.cmpi ne, %1, %c0_i32_0 : i32
    scf.if %2 {
      %cst_15 = arith.constant 0.000000e+00 : f32
      %20 = vector.broadcast %cst_15 : f32 to vector<8x1xf32>
      %c0_16 = arith.constant 0 : index
      %c0_17 = arith.constant 0 : index
      %21 = vector.load %arg5[%c0_16, %c0_17] : memref<8x1xf32, #tpu.memory_space<vmem>>, vector<8x1xf32>
      tpu.vector_store %arg5[%c0_16, %c0_17], %20 {strides = array<i32>} : memref<8x1xf32, #tpu.memory_space<vmem>>, vector<8x1xf32>,
      %cst_18 = arith.constant 0.000000e+00 : f32
      %22 = vector.broadcast %cst_18 : f32 to vector<8x1xf32>
      %c0_19 = arith.constant 0 : index
      %c0_20 = arith.constant 0 : index
      %23 = vector.load %arg6[%c0_19, %c0_20] : memref<8x1xf32, #tpu.memory_space<vmem>>, vector<8x1xf32>
      tpu.vector_store %arg6[%c0_19, %c0_20], %22 {strides = array<i32>} : memref<8x1xf32, #tpu.memory_space<vmem>>, vector<8x1xf32>,
    } else {
    }
    %c0 = arith.constant 0 : index
    %c0_1 = arith.constant 0 : index
    %3 = vector.load %arg2[%c0, %c0_1] : memref<8x256xf32, #tpu.memory_space<vmem>>, vector<8x256xf32>
    %c0_2 = arith.constant 0 : index
    %c0_3 = arith.constant 0 : index
    %4 = vector.load %arg3[%c0_2, %c0_3] : memref<8x256xf32, #tpu.memory_space<vmem>>, vector<8x256xf32>
    %5 = arith.subf %3, %4 : vector<8x256xf32>
    %c0_4 = arith.constant 0 : index
    %c0_5 = arith.constant 0 : index
    %6 = vector.load %arg5[%c0_4, %c0_5] : memref<8x1xf32, #tpu.memory_space<vmem>>, vector<8x1xf32>
    %cst = arith.constant dense<0.000000e+00> : vector<8xf32>
    %7 = vector.multi_reduction <add>, %5, %cst [1] : vector<8x256xf32> to vector<8xf32>
    %8 = vector.shape_cast %7 : vector<8xf32> to vector<8x1xf32>
    %9 = arith.addf %6, %8 : vector<8x1xf32>
    %c0_6 = arith.constant 0 : index
    %c0_7 = arith.constant 0 : index
    %10 = vector.load %arg5[%c0_6, %c0_7] : memref<8x1xf32, #tpu.memory_space<vmem>>, vector<8x1xf32>
    tpu.vector_store %arg5[%c0_6, %c0_7], %9 {strides = array<i32>} : memref<8x1xf32, #tpu.memory_space<vmem>>, vector<8x1xf32>,
    %c0_8 = arith.constant 0 : index
    %c0_9 = arith.constant 0 : index
    %11 = vector.load %arg6[%c0_8, %c0_9] : memref<8x1xf32, #tpu.memory_space<vmem>>, vector<8x1xf32>
    %12 = arith.mulf %5, %5 : vector<8x256xf32>
    %cst_10 = arith.constant dense<0.000000e+00> : vector<8xf32>
    %13 = vector.multi_reduction <add>, %12, %cst_10 [1] : vector<8x256xf32> to vector<8xf32>
    %14 = vector.shape_cast %13 : vector<8xf32> to vector<8x1xf32>
    %15 = arith.addf %11, %14 : vector<8x1xf32>
    %c0_11 = arith.constant 0 : index
    %c0_12 = arith.constant 0 : index
    %16 = vector.load %arg6[%c0_11, %c0_12] : memref<8x1xf32, #tpu.memory_space<vmem>>, vector<8x1xf32>
    tpu.vector_store %arg6[%c0_11, %c0_12], %15 {strides = array<i32>} : memref<8x1xf32, #tpu.memory_space<vmem>>, vector<8x1xf32>,
    %c0_i32_13 = arith.constant 0 : i32
    %17 = arith.cmpi eq, %arg1, %c0_i32_13 : i32
    %18 = arith.extui %17 : i1 to i32
    %c0_i32_14 = arith.constant 0 : i32
    %19 = arith.cmpi ne, %18, %c0_i32_14 : i32
    scf.if %19 {
      %c0_15 = arith.constant 0 : index
      %c0_16 = arith.constant 0 : index
      %20 = vector.load %arg5[%c0_15, %c0_16] : memref<8x1xf32, #tpu.memory_space<vmem>>, vector<8x1xf32>
      %c0_17 = arith.constant 0 : index
      %c0_18 = arith.constant 0 : index
      %21 = vector.load %arg6[%c0_17, %c0_18] : memref<8x1xf32, #tpu.memory_space<vmem>>, vector<8x1xf32>
      %cst_19 = arith.constant 3.906250e-03 : f32
      %22 = vector.broadcast %cst_19 : f32 to vector<8x1xf32>
      %23 = arith.mulf %21, %22 : vector<8x1xf32>
      %24 = arith.mulf %20, %20 : vector<8x1xf32>
      %cst_20 = arith.constant 7.62939453E-6 : f32
      %25 = vector.broadcast %cst_20 : f32 to vector<8x1xf32>
      %26 = arith.mulf %25, %24 : vector<8x1xf32>
      %27 = arith.subf %23, %26 : vector<8x1xf32>
      %c0_21 = arith.constant 0 : index
      %c0_22 = arith.constant 0 : index
      %28 = vector.load %arg4[%c0_21, %c0_22] : memref<8x1xf32, #tpu.memory_space<vmem>>, vector<8x1xf32>
      tpu.vector_store %arg4[%c0_21, %c0_22], %27 {strides = array<i32>} : memref<8x1xf32, #tpu.memory_space<vmem>>, vector<8x1xf32>,
    } else {
    }
    return
  }
  func.func @transform_0(%arg0: i32, %arg1: i32) -> (i32, i32) {
    %c0_i32 = arith.constant 0 : i32
    return %arg0, %arg1 : i32, i32
  }
  func.func @transform_1(%arg0: i32, %arg1: i32) -> (i32, i32) {
    %c0_i32 = arith.constant 0 : i32
    return %arg0, %arg1 : i32, i32
  }
  func.func @transform_2(%arg0: i32, %arg1: i32) -> (i32, i32) {
    %c0_i32 = arith.constant 0 : i32
    %c0_i32_0 = arith.constant 0 : i32
    return %arg0, %c0_i32 : i32, i32
  }
}

</mosaic_0001>

<llo_original>
// kernel: tpu_custom_call.1
$region0: #{tpu_custom_call.1}
  #allocation0 [shape = 'u32[]', space=smem, size = 0x4, offset = 0x4, fixed_abs, tag = 'smem constant byte address 0x4 - core index']
  #allocation1 [shape = 'u32[144,128]{1,0:T(1,128)}', space=vmem, size = 0x12000, scoped, tag = 'internal scratch']
  #allocation2 [shape = 'f32[8,1]{1,0:T(8,128)}', space=vmem, size = 0x1000, scoped, tag = 'scratch operand']
  #allocation3 [shape = 'f32[8,1]{1,0:T(8,128)}', space=vmem, size = 0x1000, scoped, tag = 'scratch operand']
  %s0 = inlined_call_operand.hbm [shape: f32[8,256], index: 0, kind: input, shape index: {}]
  %s1 = inlined_call_operand.hbm [shape: f32[8,256], index: 1, kind: input, shape index: {}]
  %s2 = inlined_call_operand.vmem [shape: f32[8,1], index: 2, kind: output, shape index: {}]
  %s3 = sld [smem:[#allocation0]]
  $region34: #{tpu_custom_call.1} parent=0
    _
  %s5 = ssub.s32 1, %s3
  %s6 = scalar_select 0, %s5, %s3
  $region1: #{tpu_custom_call.1} parent=0
    #allocation4 [shape = 'u8[8192]{0}', space=vmem, size = 0x2000, scoped, tag = 'input window, operand 0, single buffered']
    #allocation5 [shape = 's32[1]{0}', space=sflag, size = 0x4, scoped, tag = 'scoped memory for tpu_custom_call.1']
    #allocation6 [shape = 'u8[8192]{0}', space=vmem, size = 0x2000, scoped, tag = 'input window, operand 1, single buffered']
    #allocation7 [shape = 's32[1]{0}', space=sflag, size = 0x4, scoped, tag = 'scoped memory for tpu_custom_call.1']
    %7 = vsyncpa [#allocation5], 0
    %8 = vsyncpa [#allocation7], 0
    // Predicated region
    $region2: #{tpu_custom_call.1} parent=1 // pred_check
      _
    $region3: #{tpu_custom_call.1} parent=1 // pred_check_branch
      %10 = sbr.rel (0) target = $region5
    $region4: #{tpu_custom_call.1} parent=1 // pred_region
      %s12 = ssub.s32 256, 256
      %13 = vsyncadd [#allocation5], %s12
      %s15 = sshll.u32 [#allocation4], 4
      %s16 = int_to_ptr.vmem [resolvable:$true] %s15
      %18 = dma.hbm_to_vmem [thread:$0]  %s0, 256, %s16, [#allocation5]
    $region5: #{tpu_custom_call.1} parent=1 // pred_fallthru
      _
    // Predicated region
    $region6: #{tpu_custom_call.1} parent=1 // pred_check
      _
    $region7: #{tpu_custom_call.1} parent=1 // pred_check_branch
      %20 = sbr.rel (0) target = $region9
    $region8: #{tpu_custom_call.1} parent=1 // pred_region
      %s22 = ssub.s32 256, 256
      %23 = vsyncadd [#allocation7], %s22
      %s25 = sshll.u32 [#allocation6], 4
      %s26 = int_to_ptr.vmem [resolvable:$true] %s25
      %28 = dma.hbm_to_vmem [thread:$0]  %s1, 256, %s26, [#allocation7]
    $region9: #{tpu_custom_call.1} parent=1 // pred_fallthru
      _
    // Predicated region
    $region10: #{tpu_custom_call.1} parent=1 // pred_check
      _
    $region11: #{tpu_custom_call.1} parent=1 // pred_check_branch
      %30 = sbr.rel (0) target = $region13
    $region12: #{tpu_custom_call.1} parent=1 // pred_region
      %31 = dma.done [#allocation5], 256
    $region13: #{tpu_custom_call.1} parent=1 // pred_fallthru
      _
    // Predicated region
    $region14: #{tpu_custom_call.1} parent=1 // pred_check
      _
    $region15: #{tpu_custom_call.1} parent=1 // pred_check_branch
      %33 = sbr.rel (0) target = $region17
    $region16: #{tpu_custom_call.1} parent=1 // pred_region
      %34 = dma.done [#allocation7], 256
    $region17: #{tpu_custom_call.1} parent=1 // pred_fallthru
      _
    %p35 = scmp.eq.s32.totalorder 0, 0
    // Predicated region
    $region18: #{tpu_custom_call.1} parent=1 // pred_check
      %p36 = pneg %p35
    $region19: #{tpu_custom_call.1} parent=1 // pred_check_branch
      %38 = sbr.rel (%p36) target = $region21
    $region20: #{tpu_custom_call.1} parent=1 // pred_region
      %vm39 = vcmask 7168
      %40 = vst.msk [vmem:[#allocation2] sm:$0xff] %vm39, 0.0
      %41 = vst.msk [vmem:[#allocation3] sm:$0xff] %vm39, 0.0
    $region21: #{tpu_custom_call.1} parent=1 // pred_fallthru
      _
    %v42 = vld [vmem:[#allocation4] sm:$0xff]
    %v43 = vld [vmem:[#allocation4 + $0x8] sm:$0xff]
    %v44 = vld [vmem:[#allocation6] sm:$0xff]
    %v45 = vld [vmem:[#allocation6 + $0x8] sm:$0xff]
    %v46 = vsub.f32 %v42, %v44
    %v47 = vsub.f32 %v43, %v45
    %v48 = vld [vmem:[#allocation2] sm:$0xff]
    %v49 = vadd.f32 %v46, %v47
    %50 = vadd.xlane.f32.xlu0 %v49
    %v51 = vpop.xlane.xlu0 %50
    %v52 = vadd.f32 %v48, %v51
    %vm53 = vcmask 7168
    %54 = vst.msk [vmem:[#allocation2] sm:$0xff] %vm53, %v52
    %v55 = vld [vmem:[#allocation3] sm:$0xff]
    %v56 = vmul.f32 %v46, %v46
    %v57 = vmul.f32 %v47, %v47
    %v58 = vadd.f32 %v56, %v57
    %59 = vadd.xlane.f32.xlu0 %v58
    %v60 = vpop.xlane.xlu0 %59
    %v61 = vadd.f32 %v55, %v60
    %62 = vst.msk [vmem:[#allocation3] sm:$0xff] %vm53, %v61
    // Predicated region
    $region22: #{tpu_custom_call.1} parent=1 // pred_check
      %p63 = pneg %p35
    $region23: #{tpu_custom_call.1} parent=1 // pred_check_branch
      %65 = sbr.rel (%p63) target = $region25
    $region24: #{tpu_custom_call.1} parent=1 // pred_region
      %v66 = vld [vmem:[#allocation2] sm:$0xff]
      %v67 = vld [vmem:[#allocation3] sm:$0xff]
      %v68 = vmul.f32 %v67, 0.00390625
      %v69 = vmul.f32 %v66, %v66
      %v70 = vmul.f32 %v69, 7.6293945e-06
      %v71 = vsub.f32 %v68, %v70
      %72 = vst.msk [vmem:[%s2] sm:$0xff] %vm53, %v71
    $region25: #{tpu_custom_call.1} parent=1 // pred_fallthru
      _
    // Predicated region
    $region26: #{tpu_custom_call.1} parent=1 // pred_check
      _
    $region27: #{tpu_custom_call.1} parent=1 // pred_check_branch
      %74 = sbr.rel (0) target = $region29
    $region28: #{tpu_custom_call.1} parent=1 // pred_region
      _
    $region29: #{tpu_custom_call.1} parent=1 // pred_fallthru
      _
    // Predicated region
    $region30: #{tpu_custom_call.1} parent=1 // pred_check
      _
    $region31: #{tpu_custom_call.1} parent=1 // pred_check_branch
      %76 = sbr.rel (0) target = $region33
    $region32: #{tpu_custom_call.1} parent=1 // pred_region
      _
    $region33: #{tpu_custom_call.1} parent=1 // pred_fallthru
      _
    %77 = vsyncpa [#allocation5], 1
    %78 = vsyncpa [#allocation7], 1

</llo_original>
